<compile_context>
chip_gen: v7x
topology: tpu7x:2x2x1
jax: 0.10.0
libtpu: 0.0.40
codegen_flags: <defaults>
</compile_context>

<pallas_src>
import jax
import jax.numpy as jnp
from jax import lax
from jax.experimental import pallas as pl
from jax.experimental.pallas import tpu as pltpu

LANE = 128
DEFAULT_BLOCK_BUDGET_BYTES = 8 * 1024 * 1024   # per-input-block DMA target
MAX_B_TILE = 1024                              # bounds the accumulator block


def _round_down(x, m):
    return (x // m) * m


def _vmem_limit_bytes(in_block_bytes, out_block_bytes):
    """Double-buffered blocks + fused-temp headroom + slack, capped to 3/4 VMEM."""
    try:
        cap = int(pltpu.get_tpu_info().vmem_capacity_bytes)
    except Exception:
        cap = 64 << 20  # v7x per-core VMEM: the smallest of v5e/v6e/v7x
    need = 3 * in_block_bytes + 3 * out_block_bytes + (8 << 20)
    return int(min(need, (cap * 3) // 4))


def _batched_rowsum_kernel(x_ref, out_ref):
    """Whole image(s) per step: (b_tile, 3, n_rows, 128) -> (b_tile, 3, 128) f32."""
    out_ref[...] = jnp.sum(x_ref[...], axis=2, dtype=jnp.float32)


def _make_accum_rowsum_kernel(row_tile, n_rows, k_per_split, need_mask):
    """Large-image path: accumulate (3, row_tile, 128) chunks into a (3, 128) slab."""

    def kernel(x_ref, acc_ref):
        k = pl.program_id(2)

        @pl.when(k == 0)
        def _init():
            acc_ref[...] = jnp.zeros_like(acc_ref)

        x = x_ref[...]                                    # (3, row_tile, 128)
        if need_mask:
            s = pl.program_id(0)
            start_row = (s * k_per_split + k) * row_tile
            valid = n_rows - start_row                    # <= 0 on duplicate tail steps
            row_ids = lax.broadcasted_iota(jnp.int32, (row_tile, LANE), 0)
            x = jnp.where(row_ids < valid, x, jnp.zeros((), x.dtype))
        acc_ref[...] += jnp.sum(x, axis=1, dtype=jnp.float32)

    return kernel


def l_color(x, loss_weight=1.0, block_budget_bytes=None):
    """Pallas implementation of L_color.forward.  x: (b, 3, h, w) -> (b, 1, 1, 1) f32."""
    if block_budget_bytes is None:
        block_budget_bytes = DEFAULT_BLOCK_BUDGET_BYTES

    b, c, h, w = x.shape
    assert c == 3, "L_color expects 3 channels (RGB)"
    hw = h * w
    itemsize = jnp.dtype(x.dtype).itemsize

    # ---- layout: (b, 3, h, w) -> (b, 3, n_rows, 128), lane-dense -------------
    n_rows = pl.cdiv(hw, LANE)
    x_flat = x.reshape(b, c, hw)
    if n_rows * LANE != hw:
        # Rare ragged-lane case: zero pad (harmless for sums; divide by true hw).
        x_flat = jnp.pad(x_flat, ((0, 0), (0, 0), (0, n_rows * LANE - hw)))
    x4 = x_flat.reshape(b, c, n_rows, LANE)

    bytes_per_row = c * LANE * itemsize
    bytes_per_image = n_rows * bytes_per_row
    rows_budget = max(8, _round_down(block_budget_bytes // bytes_per_row, 8))

    if n_rows <= rows_budget:
        # ---- small / medium images: one (possibly batched) block per image ---
        b_tile = max(1, min(b, MAX_B_TILE, block_budget_bytes // max(1, bytes_per_image)))
        grid_b = pl.cdiv(b, b_tile)      # ragged batch edge: clipped DMA, no pad
        in_block_bytes = b_tile * bytes_per_image
        out_block_bytes = b_tile * c * LANE * 4

        partial = pl.pallas_call(
            _batched_rowsum_kernel,
            out_shape=jax.ShapeDtypeStruct((b, c, LANE), jnp.float32),
            grid=(grid_b,),
            in_specs=[pl.BlockSpec((b_tile, c, n_rows, LANE),
                                   lambda i: (i, 0, 0, 0))],
            out_specs=pl.BlockSpec((b_tile, c, LANE), lambda i: (i, 0, 0)),
            compiler_params=pltpu.CompilerParams(
                dimension_semantics=("parallel",),
                vmem_limit_bytes=_vmem_limit_bytes(in_block_bytes,
                                                   out_block_bytes),
            ),
        )(x4)
        sums = jnp.sum(partial, axis=-1)                       # (b, 3) f32
    else:
        # ---- large images: tile the row axis, accumulate across it ----------
        row_tile = rows_budget                                 # multiple of 8
        n_k_blocks = pl.cdiv(n_rows, row_tile)                 # >= 2 here
        # Split the reduction over a leading parallel axis when the batch axis
        # alone cannot feed both v7x TensorCores.
        n_split = 2 if (b == 1 and n_k_blocks >= 2) else 1
        k_per_split = pl.cdiv(n_k_blocks, n_split)
        # Any partial / duplicated (clamped) step is zeroed by the in-kernel mask.
        need_mask = (n_split * k_per_split * row_tile) != n_rows

        def x_index(s, i, k):
            # Clamp so the (at most one) extra step of the last split re-points
            # at the previous block: Pallas skips the re-fetch and the mask
            # zeroes its contribution.
            kk = jnp.minimum(s * k_per_split + k, n_k_blocks - 1)
            return (i, 0, kk, 0)

        in_block_bytes = row_tile * bytes_per_row
        out_block_bytes = c * LANE * 4

        partial = pl.pallas_call(
            _make_accum_rowsum_kernel(row_tile, n_rows, k_per_split, need_mask),
            out_shape=jax.ShapeDtypeStruct((n_split, b, c, LANE), jnp.float32),
            grid=(n_split, b, k_per_split),                    # reduction last
            in_specs=[pl.BlockSpec((None, c, row_tile, LANE), x_index)],
            out_specs=pl.BlockSpec((None, None, c, LANE),
                                   lambda s, i, k: (s, i, 0, 0)),
            compiler_params=pltpu.CompilerParams(
                dimension_semantics=("parallel", "parallel", "arbitrary"),
                vmem_limit_bytes=_vmem_limit_bytes(in_block_bytes,
                                                   out_block_bytes),
            ),
        )(x4)
        sums = jnp.sum(partial, axis=(0, -1))                  # (b, 3) f32

    # ---- tiny epilogue in plain XLA (a few scalars per image) ----------------
    mean_rgb = sums / jnp.float32(hw)                          # true pixel count
    mr, mg, mb = mean_rgb[:, 0], mean_rgb[:, 1], mean_rgb[:, 2]
    drg = (mr - mg) ** 2
    drb = (mr - mb) ** 2
    dgb = (mb - mg) ** 2
    k = jnp.sqrt(drg ** 2 + drb ** 2 + dgb ** 2)
    out = jnp.float32(loss_weight) * k                         # keep f32 (review note)
    return out.reshape(b, 1, 1, 1)


def _l_color_ref(x, loss_weight=1.0):
    """Pure-JAX reference mirroring the PyTorch forward."""
    mean_rgb = jnp.mean(x, axis=(2, 3), keepdims=True)         # (b, 3, 1, 1)
    mr = mean_rgb[:, 0:1]
    mg = mean_rgb[:, 1:2]
    mb = mean_rgb[:, 2:3]
    drg = (mr - mg) ** 2
    drb = (mr - mb) ** 2
    dgb = (mb - mg) ** 2
    k = jnp.sqrt(drg ** 2 + drb ** 2 + dgb ** 2)
    return loss_weight * k


if __name__ == "__main__":
    key = jax.random.PRNGKey(0)

    # 1) Small-image (single-block, batched) path at the module's natural shape.
    b, c, h, w = 2, 3, 16, 16
    x = jax.random.uniform(key, (b, c, h, w), dtype=jnp.float32)
    out = jax.block_until_ready(l_color(x, loss_weight=1.0))
    ref = _l_color_ref(x, loss_weight=1.0)
    assert out.shape == (b, 1, 1, 1), out.shape
    assert jnp.allclose(out, ref, atol=1e-6, rtol=1e-5), (out, ref)

    # 2) Large-image (row-tiled, split + ragged-mask) path, exercised at a tiny
    #    size by shrinking the per-block byte budget.  Also hits hw % 128 != 0.
    x2 = jax.random.uniform(jax.random.PRNGKey(1), (1, 3, 45, 67),
                            dtype=jnp.float32)
    out2 = jax.block_until_ready(
        l_color(x2, loss_weight=0.5, block_budget_bytes=16 * 1024))
    ref2 = _l_color_ref(x2, loss_weight=0.5)
    assert out2.shape == (1, 1, 1, 1), out2.shape
    assert jnp.allclose(out2, ref2, atol=1e-6, rtol=1e-5), (out2, ref2)

    print("KERNEL_OK")
</pallas_src>

<mosaic_0001>
module attributes {stable_mosaic.version = 11 : i64} {
  func.func @_batched_rowsum_kernel(%arg0: i32, %arg1: memref<2x3x2x128xf32, #tpu.memory_space<vmem>>, %arg2: memref<2x3x128xf32, #tpu.memory_space<vmem>>) attributes {dimension_semantics = [#tpu.dimension_semantics<parallel>], iteration_bounds = array<i64: 1>, scalar_prefetch = 0 : i64, scratch_operands = 0 : i64, tpu.core_type = #tpu.core_type<tc>, window_params = [{transform_indices = @transform_0, window_bounds = array<i64: 2, 3, 2, 128>}, {transform_indices = @transform_1, window_bounds = array<i64: 2, 3, 128>}]} {
    %c0 = arith.constant 0 : index
    %c0_0 = arith.constant 0 : index
    %c0_1 = arith.constant 0 : index
    %c0_2 = arith.constant 0 : index
    %0 = vector.load %arg1[%c0, %c0_0, %c0_1, %c0_2] : memref<2x3x2x128xf32, #tpu.memory_space<vmem>>, vector<2x3x2x128xf32>
    %cst = arith.constant dense<0.000000e+00> : vector<2x3x128xf32>
    %1 = vector.multi_reduction <add>, %0, %cst [2] : vector<2x3x2x128xf32> to vector<2x3x128xf32>
    %c0_3 = arith.constant 0 : index
    %c0_4 = arith.constant 0 : index
    %c0_5 = arith.constant 0 : index
    %2 = vector.load %arg2[%c0_3, %c0_4, %c0_5] : memref<2x3x128xf32, #tpu.memory_space<vmem>>, vector<2x3x128xf32>
    tpu.vector_store %arg2[%c0_3, %c0_4, %c0_5], %1 {strides = array<i32>} : memref<2x3x128xf32, #tpu.memory_space<vmem>>, vector<2x3x128xf32>,
    return
  }
  func.func @transform_0(%arg0: i32) -> (i32, i32, i32, i32) {
    %c0_i32 = arith.constant 0 : i32
    %c0_i32_0 = arith.constant 0 : i32
    %c0_i32_1 = arith.constant 0 : i32
    %c0_i32_2 = arith.constant 0 : i32
    return %arg0, %c0_i32, %c0_i32_0, %c0_i32_1 : i32, i32, i32, i32
  }
  func.func @transform_1(%arg0: i32) -> (i32, i32, i32) {
    %c0_i32 = arith.constant 0 : i32
    %c0_i32_0 = arith.constant 0 : i32
    %c0_i32_1 = arith.constant 0 : i32
    return %arg0, %c0_i32, %c0_i32_0 : i32, i32, i32
  }
}

</mosaic_0001>

<llo_original>
// kernel: tpu_custom_call.1
$region0: #{tpu_custom_call.1}
  #allocation0 [shape = 'u32[]', space=smem, size = 0x4, offset = 0x4, fixed_abs, tag = 'smem constant byte address 0x4 - core index']
  #allocation1 [shape = 'u32[144,128]{1,0:T(1,128)}', space=vmem, size = 0x12000, scoped, tag = 'internal scratch']
  %s0 = inlined_call_operand.hbm [shape: f32[2,3,2,128], index: 0, kind: input, shape index: {}]
  %s1 = inlined_call_operand.vmem [shape: f32[2,3,128], index: 1, kind: output, shape index: {}]
  %s2 = sld [smem:[#allocation0]]
  $region18: #{tpu_custom_call.1} parent=0
    _
  %s4 = ssub.s32 1, %s2
  %s5 = scalar_select 0, %s4, %s2
  $region1: #{tpu_custom_call.1} parent=0
    #allocation2 [shape = 'u8[6144]{0}', space=vmem, size = 0x1800, scoped, tag = 'input window, operand 0, single buffered']
    #allocation3 [shape = 's32[1]{0}', space=sflag, size = 0x4, scoped, tag = 'scoped memory for tpu_custom_call.1']
    %6 = vsyncpa [#allocation3], 0
    // Predicated region
    $region2: #{tpu_custom_call.1} parent=1 // pred_check
      _
    $region3: #{tpu_custom_call.1} parent=1 // pred_check_branch
      %8 = sbr.rel (0) target = $region5
    $region4: #{tpu_custom_call.1} parent=1 // pred_region
      %s10 = ssub.s32 192, 192
      %11 = vsyncadd [#allocation3], %s10
      %s12 = sshll.u32 [#allocation2], 4
      %s13 = int_to_ptr.vmem [resolvable:$true] %s12
      %18 = dma.hbm_to_vmem [thread:$0]  %s0, 192, %s13, [#allocation3], 32, 32, 2
    $region5: #{tpu_custom_call.1} parent=1 // pred_fallthru
      _
    // Predicated region
    $region6: #{tpu_custom_call.1} parent=1 // pred_check
      _
    $region7: #{tpu_custom_call.1} parent=1 // pred_check_branch
      %20 = sbr.rel (0) target = $region9
    $region8: #{tpu_custom_call.1} parent=1 // pred_region
      %21 = dma.done [#allocation3], 192
    $region9: #{tpu_custom_call.1} parent=1 // pred_fallthru
      _
    %v22 = vld [vmem:[#allocation2] sm:$0x3]
    %v23 = vld [vmem:[#allocation2 + $0x2] sm:$0x3]
    %v24 = vld [vmem:[#allocation2 + $0x4] sm:$0x3]
    %v25 = vld [vmem:[#allocation2 + $0x6] sm:$0x3]
    %v26 = vld [vmem:[#allocation2 + $0x8] sm:$0x3]
    %v27 = vld [vmem:[#allocation2 + $0xa] sm:$0x3]
    %vm28 = vcmask 1041408
    %v29 = vsel %vm28, %v22, 0.0
    %v30 = vrot.slane %v29, 4
    %v31 = vadd.f32 %v29, %v30
    %v32 = vrot.slane %v31, 2
    %v33 = vadd.f32 %v31, %v32
    %v34 = vrot.slane %v33, 1
    %v35 = vadd.f32 %v33, %v34
    %v36 = vsel %vm28, %v23, 0.0
    %v37 = vrot.slane %v36, 4
    %v38 = vadd.f32 %v36, %v37
    %v39 = vrot.slane %v38, 2
    %v40 = vadd.f32 %v38, %v39
    %v41 = vrot.slane %v40, 1
    %v42 = vadd.f32 %v40, %v41
    %v43 = vsel %vm28, %v24, 0.0
    %v44 = vrot.slane %v43, 4
    %v45 = vadd.f32 %v43, %v44
    %v46 = vrot.slane %v45, 2
    %v47 = vadd.f32 %v45, %v46
    %v48 = vrot.slane %v47, 1
    %v49 = vadd.f32 %v47, %v48
    %v50 = vsel %vm28, %v25, 0.0
    %v51 = vrot.slane %v50, 4
    %v52 = vadd.f32 %v50, %v51
    %v53 = vrot.slane %v52, 2
    %v54 = vadd.f32 %v52, %v53
    %v55 = vrot.slane %v54, 1
    %v56 = vadd.f32 %v54, %v55
    %v57 = vsel %vm28, %v26, 0.0
    %v58 = vrot.slane %v57, 4
    %v59 = vadd.f32 %v57, %v58
    %v60 = vrot.slane %v59, 2
    %v61 = vadd.f32 %v59, %v60
    %v62 = vrot.slane %v61, 1
    %v63 = vadd.f32 %v61, %v62
    %v64 = vsel %vm28, %v27, 0.0
    %v65 = vrot.slane %v64, 4
    %v66 = vadd.f32 %v64, %v65
    %v67 = vrot.slane %v66, 2
    %v68 = vadd.f32 %v66, %v67
    %v69 = vrot.slane %v68, 1
    %v70 = vadd.f32 %v68, %v69
    %vm77 = vcmask 1041409
    %v78 = vsel %vm77, %v42, %v35
    %vm79 = vcmask 1042434
    %v80 = vsel %vm79, %v49, %v78
    %v81 = vsel %vm77, %v63, %v56
    %v82 = vsel %vm79, %v70, %v81
    %85 = vst [vmem:[%s1] sm:$0x7] %v80
    %86 = vst [vmem:[%s1 + $0x4] sm:$0x7] %v82
    // Predicated region
    $region10: #{tpu_custom_call.1} parent=1 // pred_check
      _
    $region11: #{tpu_custom_call.1} parent=1 // pred_check_branch
      %88 = sbr.rel (0) target = $region13
    $region12: #{tpu_custom_call.1} parent=1 // pred_region
      _
    $region13: #{tpu_custom_call.1} parent=1 // pred_fallthru
      _
    // Predicated region
    $region14: #{tpu_custom_call.1} parent=1 // pred_check
      _
    $region15: #{tpu_custom_call.1} parent=1 // pred_check_branch
      %90 = sbr.rel (0) target = $region17
    $region16: #{tpu_custom_call.1} parent=1 // pred_region
      _
    $region17: #{tpu_custom_call.1} parent=1 // pred_fallthru
      _
    %91 = vsyncpa [#allocation3], 1

</llo_original>
